<compile_context>
chip_gen: v7x
topology: tpu7x:2x2x1
jax: 0.10.0
libtpu: 0.0.40
codegen_flags: <defaults>
</compile_context>

<pallas_src>
import math

import jax
import jax.numpy as jnp
from jax import lax
from jax.experimental import pallas as pl
from jax.experimental.pallas import tpu as pltpu


def _convt_stats_kernel(x_ref, w_ref, y_ref, stat_ref):
    # x_ref: (tm, G*Cin) bf16    w_ref: (G*Cin, L) bf16
    # y_ref: (tm, L) bf16        stat_ref: (1, 2, L) f32 carried accumulator (sum, sumsq)
    @pl.when(pl.program_id(1) == 0)
    def _():
        stat_ref[...] = jnp.zeros_like(stat_ref)

    yf = jnp.dot(x_ref[...], w_ref[...], preferred_element_type=jnp.float32)
    y_ref[...] = yf.astype(y_ref.dtype)

    su = jnp.sum(yf, axis=0, keepdims=True)        # (1, L)
    sq = jnp.sum(yf * yf, axis=0, keepdims=True)   # (1, L)
    stat_ref[0:1, 0:1, :] += su[None]
    stat_ref[0:1, 1:2, :] += sq[None]


def _bn_relu_kernel(y_ref, scale_ref, shift_ref, o_ref):
    # y_ref: (tm, L) bf16   scale_ref/shift_ref: (1, L) f32   o_ref: (tm, L) f32
    y = y_ref[...].astype(jnp.float32)
    o_ref[...] = jnp.maximum(y * scale_ref[...] + shift_ref[...], 0.0)


def _pick_rows(n_rows, target):
    """Largest row-tile <= target that divides n_rows and keeps sublane alignment."""
    target = int(min(max(target, 8), n_rows))
    if target >= n_rows:
        return n_rows
    for align in (16, 8):  # prefer 16 (bf16 sublane packing), fall back to 8
        for cand in range(target, align - 1, -1):
            if n_rows % cand == 0 and cand % align == 0:
                return cand
    return n_rows  # full extent is always legal


def conv_up_2d_normed_relu(x_nchw, weight, bias, gamma, beta, eps=1e-5,
                           tm=512, vmem_limit_bytes=64 * 1024 * 1024):
    """ConvTranspose2d(k=2, s=2, p=0) + BatchNorm2d (training batch stats) + ReLU."""
    N, Cin, H, W = x_nchw.shape
    Cin_w, Cout, kH, kW = weight.shape
    assert (Cin_w, kH, kW) == (Cin, 2, 2)
    del bias  # per-channel constant before training-mode BN cancels exactly

    M = N * H * W
    P = 4 * Cout                       # taps concatenated along the channel axis
    # Fold G consecutive rows so the flat last dim L = G*P is a multiple of 128.
    g = 128 // math.gcd(P, 128)
    G = g if (g > 1 and M % g == 0) else 1
    L = G * P
    R = M // G

    # Input: NCHW -> (R, G*Cin) bf16.
    # TODO(synk): accepting NHWC input (or reading NCHW directly in-kernel with a
    # transposed dot_general) would remove this one XLA transpose over x.
    x_rg = (jnp.transpose(x_nchw, (0, 2, 3, 1))
            .reshape(R, G * Cin).astype(jnp.bfloat16))

    # Weights: (Cin, Cout, 2, 2) -> (Cin, 4*Cout) with column order (kh, kw, c);
    # block-diagonal replication when rows are folded (G > 1).
    w_cat = jnp.transpose(weight, (0, 2, 3, 1)).reshape(Cin, P).astype(jnp.float32)
    w_bd = jnp.kron(jnp.eye(G, dtype=jnp.float32), w_cat) if G > 1 else w_cat
    w_bd = w_bd.astype(jnp.bfloat16)

    # ---- Kernel A: fused transposed-conv matmul + BN batch-stat accumulation ----
    budget = 24 * 1024 * 1024  # tile budget, well under the 64 MiB vmem limit (v7x safe)
    row_bytes_a = (G * Cin) * 2 + L * 2 + L * 4      # bf16 in + bf16 out + f32 temps
    w_bytes = 2 * (G * Cin) * L * 2                  # weights (double-buffered)
    cap_a = max(8, (budget - w_bytes) // (2 * row_bytes_a))
    tm_a = _pick_rows(R, min(tm, cap_a))
    n_tiles = R // tm_a
    PC = 2 if (n_tiles % 2 == 0 and n_tiles >= 2) else 1   # per-core stat partials
    T = n_tiles // PC

    y, stats = pl.pallas_call(
        _convt_stats_kernel,
        out_shape=(jax.ShapeDtypeStruct((R, L), jnp.bfloat16),
                   jax.ShapeDtypeStruct((PC, 2, L), jnp.float32)),
        grid_spec=pltpu.PrefetchScalarGridSpec(
            num_scalar_prefetch=0,
            grid=(PC, T),
            in_specs=[pl.BlockSpec((tm_a, G * Cin), lambda p, i: (p * T + i, 0)),
                      pl.BlockSpec((G * Cin, L), lambda p, i: (0, 0))],
            out_specs=(pl.BlockSpec((tm_a, L), lambda p, i: (p * T + i, 0)),
                       pl.BlockSpec((1, 2, L), lambda p, i: (p, 0, 0)))),
        compiler_params=pltpu.CompilerParams(
            dimension_semantics=("parallel", "arbitrary"),
            vmem_limit_bytes=vmem_limit_bytes),
    )(x_rg, w_bd)

    # ---- BN parameters from batch statistics (tiny XLA epilogue) ----
    # Training-mode BatchNorm2d: biased statistics over (N, 2H, 2W) per channel.
    count = jnp.float32(4 * M)
    s = stats.reshape(PC, 2, G * 4, Cout).sum(axis=(0, 2))   # (2, Cout)
    mean = s[0] / count
    # E[y^2]-E[y]^2 can cancel for |mean| >> std; clamp to keep rsqrt well defined.
    var = jnp.maximum(s[1] / count - mean * mean, 0.0)
    scale = gamma.astype(jnp.float32) / jnp.sqrt(var + eps)
    shift = beta.astype(jnp.float32) - mean * scale
    scale_row = jnp.tile(scale, 4 * G).reshape(1, L)
    shift_row = jnp.tile(shift, 4 * G).reshape(1, L)

    # ---- Kernel B: fused scale/shift + ReLU (lane-dense elementwise pass) ----
    row_bytes_b = L * 2 + 2 * L * 4
    cap_b = max(8, budget // (2 * row_bytes_b))
    tm_b = _pick_rows(R, min(max(tm, 1024), cap_b))

    out_flat = pl.pallas_call(
        _bn_relu_kernel,
        out_shape=jax.ShapeDtypeStruct((R, L), jnp.float32),
        grid_spec=pltpu.PrefetchScalarGridSpec(
            num_scalar_prefetch=0,
            grid=(R // tm_b,),
            in_specs=[pl.BlockSpec((tm_b, L), lambda i: (i, 0)),
                      pl.BlockSpec((1, L), lambda i: (0, 0)),
                      pl.BlockSpec((1, L), lambda i: (0, 0))],
            out_specs=pl.BlockSpec((tm_b, L), lambda i: (i, 0))),
        compiler_params=pltpu.CompilerParams(
            dimension_semantics=("parallel",),
            vmem_limit_bytes=vmem_limit_bytes),
    )(y, scale_row, shift_row)

    # ---- Scatter + layout: single XLA transpose ----
    # out_flat flattened row-major is ordered (n, i, j, kh, kw, c); one transpose takes
    # it straight to NCHW with out[n, c, 2i+kh, 2j+kw].
    out6 = out_flat.reshape(N, H, W, 2, 2, Cout)
    out = jnp.transpose(out6, (0, 5, 1, 3, 2, 4)).reshape(N, Cout, 2 * H, 2 * W)
    return out


def _reference(x, weight, bias, gamma, beta, eps=1e-5):
    """Pure-JAX reference: lhs-dilated conv == ConvTranspose2d, then training BN + ReLU."""
    k_oihw = jnp.transpose(jnp.flip(weight, axis=(2, 3)), (1, 0, 2, 3))
    y = lax.conv_general_dilated(
        x.astype(jnp.float32), k_oihw.astype(jnp.float32),
        window_strides=(1, 1), padding=((1, 1), (1, 1)), lhs_dilation=(2, 2),
        dimension_numbers=("NCHW", "OIHW", "NCHW"))
    y = y + bias.astype(jnp.float32)[None, :, None, None]
    mean = jnp.mean(y, axis=(0, 2, 3), keepdims=True)
    var = jnp.var(y, axis=(0, 2, 3), keepdims=True)  # biased, as in torch training BN
    yhat = (y - mean) / jnp.sqrt(var + eps)
    out = yhat * gamma[None, :, None, None] + beta[None, :, None, None]
    return jnp.maximum(out, 0.0)


if __name__ == "__main__":
    key = jax.random.PRNGKey(0)
    kx, kw_, kb, kg, kbeta = jax.random.split(key, 5)

    N, Cin, H, W = 2, 4, 16, 16
    Cout = 8

    x = jax.random.normal(kx, (N, Cin, H, W), dtype=jnp.float32)
    weight = jax.random.normal(kw_, (Cin, Cout, 2, 2), dtype=jnp.float32) * 0.1
    bias = jax.random.normal(kb, (Cout,), dtype=jnp.float32) * 0.1
    gamma = jax.random.uniform(kg, (Cout,), minval=0.5, maxval=1.5, dtype=jnp.float32)
    beta = jax.random.normal(kbeta, (Cout,), dtype=jnp.float32) * 0.1

    out = jax.block_until_ready(conv_up_2d_normed_relu(x, weight, bias, gamma, beta))
    assert out.shape == (N, Cout, 2 * H, 2 * W), out.shape

    ref = jax.block_until_ready(_reference(x, weight, bias, gamma, beta))
    max_err = float(jnp.max(jnp.abs(out - ref)))
    # bf16 intermediates / bf16 matmul operands -> relative error ~0.5%; tolerance covers it.
    assert jnp.allclose(out, ref, atol=3e-2, rtol=5e-2), max_err

    print("KERNEL_OK")
</pallas_src>

<mosaic_0001>
module attributes {stable_mosaic.version = 11 : i64} {
  func.func @_convt_stats_kernel(%arg0: i32, %arg1: i32, %arg2: memref<128x16xbf16, #tpu.memory_space<vmem>>, %arg3: memref<16x128xbf16, #tpu.memory_space<vmem>>, %arg4: memref<128x128xbf16, #tpu.memory_space<vmem>>, %arg5: memref<1x2x128xf32, #tpu.memory_space<vmem>>) attributes {dimension_semantics = [#tpu.dimension_semantics<parallel>, #tpu.dimension_semantics<arbitrary>], iteration_bounds = array<i64: 1, 1>, scalar_prefetch = 0 : i64, scratch_operands = 0 : i64, tpu.core_type = #tpu.core_type<tc>, window_params = [{transform_indices = @transform_0, window_bounds = array<i64: 128, 16>}, {pipeline_mode = #tpu.pipeline_mode<synchronous>, transform_indices = @transform_1, window_bounds = array<i64: 16, 128>}, {transform_indices = @transform_2, window_bounds = array<i64: 128, 128>}, {transform_indices = @transform_3, window_bounds = array<i64: 1, 2, 128>}]} {
    %c0_i32 = arith.constant 0 : i32
    %0 = arith.cmpi eq, %arg1, %c0_i32 : i32
    %1 = arith.extui %0 : i1 to i32
    %c0_i32_0 = arith.constant 0 : i32
    %2 = arith.cmpi ne, %1, %c0_i32_0 : i32
    scf.if %2 {
      %cst_19 = arith.constant 0.000000e+00 : f32
      %21 = vector.broadcast %cst_19 : f32 to vector<1x2x128xf32>
      %c0_20 = arith.constant 0 : index
      %c0_21 = arith.constant 0 : index
      %c0_22 = arith.constant 0 : index
      %22 = vector.load %arg5[%c0_20, %c0_21, %c0_22] : memref<1x2x128xf32, #tpu.memory_space<vmem>>, vector<1x2x128xf32>
      tpu.vector_store %arg5[%c0_20, %c0_21, %c0_22], %21 {strides = array<i32>} : memref<1x2x128xf32, #tpu.memory_space<vmem>>, vector<1x2x128xf32>,
    } else {
    }
    %c0 = arith.constant 0 : index
    %c0_1 = arith.constant 0 : index
    %3 = vector.load %arg2[%c0, %c0_1] : memref<128x16xbf16, #tpu.memory_space<vmem>>, vector<128x16xbf16>
    %c0_2 = arith.constant 0 : index
    %c0_3 = arith.constant 0 : index
    %4 = vector.load %arg3[%c0_2, %c0_3] : memref<16x128xbf16, #tpu.memory_space<vmem>>, vector<16x128xbf16>
    %cst = arith.constant dense<0.000000e+00> : vector<128x128xf32>
    %5 = tpu.matmul %3, %4, %cst {dimension_numbers = #tpu.dot_dimension_numbers<[1], [0], [0], [1], [0, 0, 1, 1], [], []>} : vector<128x16xbf16>, vector<16x128xbf16>, vector<128x128xf32> -> vector<128x128xf32>
    %6 = arith.truncf %5 : vector<128x128xf32> to vector<128x128xbf16>
    %c0_4 = arith.constant 0 : index
    %c0_5 = arith.constant 0 : index
    %7 = vector.load %arg4[%c0_4, %c0_5] : memref<128x128xbf16, #tpu.memory_space<vmem>>, vector<128x128xbf16>
    tpu.vector_store %arg4[%c0_4, %c0_5], %6 {strides = array<i32>} : memref<128x128xbf16, #tpu.memory_space<vmem>>, vector<128x128xbf16>,
    %cst_6 = arith.constant dense<0.000000e+00> : vector<128xf32>
    %8 = vector.multi_reduction <add>, %5, %cst_6 [0] : vector<128x128xf32> to vector<128xf32>
    %9 = vector.shape_cast %8 : vector<128xf32> to vector<1x128xf32>
    %10 = arith.mulf %5, %5 : vector<128x128xf32>
    %cst_7 = arith.constant dense<0.000000e+00> : vector<128xf32>
    %11 = vector.multi_reduction <add>, %10, %cst_7 [0] : vector<128x128xf32> to vector<128xf32>
    %12 = vector.shape_cast %11 : vector<128xf32> to vector<1x128xf32>
    %c0_8 = arith.constant 0 : index
    %c0_9 = arith.constant 0 : index
    %c0_10 = arith.constant 0 : index
    %13 = vector.load %arg5[%c0_8, %c0_9, %c0_10] : memref<1x2x128xf32, #tpu.memory_space<vmem>>, vector<1x1x128xf32>
    %14 = vector.shape_cast %9 : vector<1x128xf32> to vector<1x1x128xf32>
    %15 = arith.addf %13, %14 : vector<1x1x128xf32>
    %c0_11 = arith.constant 0 : index
    %c0_12 = arith.constant 0 : index
    %c0_13 = arith.constant 0 : index
    %16 = vector.load %arg5[%c0_11, %c0_12, %c0_13] : memref<1x2x128xf32, #tpu.memory_space<vmem>>, vector<1x1x128xf32>
    tpu.vector_store %arg5[%c0_11, %c0_12, %c0_13], %15 {strides = array<i32>} : memref<1x2x128xf32, #tpu.memory_space<vmem>>, vector<1x1x128xf32>,
    %c0_14 = arith.constant 0 : index
    %c1 = arith.constant 1 : index
    %c0_15 = arith.constant 0 : index
    %17 = vector.load %arg5[%c0_14, %c1, %c0_15] : memref<1x2x128xf32, #tpu.memory_space<vmem>>, vector<1x1x128xf32>
    %18 = vector.shape_cast %12 : vector<1x128xf32> to vector<1x1x128xf32>
    %19 = arith.addf %17, %18 : vector<1x1x128xf32>
    %c0_16 = arith.constant 0 : index
    %c1_17 = arith.constant 1 : index
    %c0_18 = arith.constant 0 : index
    %20 = vector.load %arg5[%c0_16, %c1_17, %c0_18] : memref<1x2x128xf32, #tpu.memory_space<vmem>>, vector<1x1x128xf32>
    tpu.vector_store %arg5[%c0_16, %c1_17, %c0_18], %19 {strides = array<i32>} : memref<1x2x128xf32, #tpu.memory_space<vmem>>, vector<1x1x128xf32>,
    return
  }
  func.func @transform_0(%arg0: i32, %arg1: i32) -> (i32, i32) {
    %c1_i32 = arith.constant 1 : i32
    %0 = arith.muli %arg0, %c1_i32 : i32
    %1 = arith.addi %0, %arg1 : i32
    %c0_i32 = arith.constant 0 : i32
    %c0_i32_0 = arith.constant 0 : i32
    return %1, %c0_i32 : i32, i32
  }
  func.func @transform_1(%arg0: i32, %arg1: i32) -> (i32, i32) {
    %c0_i32 = arith.constant 0 : i32
    %c0_i32_0 = arith.constant 0 : i32
    %c0_i32_1 = arith.constant 0 : i32
    return %c0_i32, %c0_i32_0 : i32, i32
  }
  func.func @transform_2(%arg0: i32, %arg1: i32) -> (i32, i32) {
    %c1_i32 = arith.constant 1 : i32
    %0 = arith.muli %arg0, %c1_i32 : i32
    %1 = arith.addi %0, %arg1 : i32
    %c0_i32 = arith.constant 0 : i32
    %c0_i32_0 = arith.constant 0 : i32
    return %1, %c0_i32 : i32, i32
  }
  func.func @transform_3(%arg0: i32, %arg1: i32) -> (i32, i32, i32) {
    %c0_i32 = arith.constant 0 : i32
    %c0_i32_0 = arith.constant 0 : i32
    %c0_i32_1 = arith.constant 0 : i32
    return %arg0, %c0_i32, %c0_i32_0 : i32, i32, i32
  }
}

</mosaic_0001>

<llo_original>
// kernel: tpu_custom_call.1
$region0: #{tpu_custom_call.1}
  #allocation0 [shape = 'u32[]', space=smem, size = 0x4, offset = 0x4, fixed_abs, tag = 'smem constant byte address 0x4 - core index']
  #allocation1 [shape = 'u32[144,128]{1,0:T(1,128)}', space=vmem, size = 0x12000, scoped, tag = 'internal scratch']
  %s0 = inlined_call_operand.hbm [shape: bf16[128,16], index: 0, kind: input, shape index: {}]
  %s1 = inlined_call_operand.hbm [shape: bf16[16,128], index: 1, kind: input, shape index: {}]
  %s2 = inlined_call_operand.hbm [shape: bf16[128,128], index: 2, kind: output, shape index: {0}]
  %s3 = inlined_call_operand.hbm [shape: f32[1,2,128], index: 3, kind: output, shape index: {1}]
  %4 = xla_tuple %s2, %s3
  %s5 = sld [smem:[#allocation0]]
  $region38: #{tpu_custom_call.1} parent=0
    _
  %s7 = ssub.s32 1, %s5
  %s8 = scalar_select 0, %s7, %s5
  $region1: #{tpu_custom_call.1} parent=0
    #allocation2 [shape = 'u8[32768]{0}', space=vmem, size = 0x8000, scoped, tag = 'input window, operand 0, single buffered']
    #allocation3 [shape = 's32[1]{0}', space=sflag, size = 0x4, scoped, tag = 'scoped memory for tpu_custom_call.1']
    #allocation4 [shape = 's32[1]{0}', space=sflag, size = 0x4, scoped, tag = 'scoped memory for tpu_custom_call.1']
    #allocation5 [shape = 'u8[4096]{0}', space=vmem, size = 0x1000, scoped, tag = 'input window, operand 1, single buffered']
    #allocation6 [shape = 's32[1]{0}', space=sflag, size = 0x4, scoped, tag = 'scoped memory for tpu_custom_call.1']
    #allocation7 [shape = 'u8[32768]{0}', space=vmem, size = 0x8000, scoped, tag = 'output window, operand 0, single buffered']
    #allocation8 [shape = 'u8[1024]{0}', space=vmem, size = 0x400, scoped, tag = 'output window, operand 1, single buffered']
    #allocation9 [shape = 's32[1]{0}', space=sflag, size = 0x4, scoped, tag = 'scoped memory for tpu_custom_call.1']
    %9 = vsyncpa [#allocation3], 0
    %10 = vsyncpa [#allocation6], 0
    %11 = vsyncpa [#allocation4], 0
    %12 = vsyncpa [#allocation9], 0
    // Predicated region
    $region2: #{tpu_custom_call.1} parent=1 // pred_check
      _
    $region3: #{tpu_custom_call.1} parent=1 // pred_check_branch
      %14 = sbr.rel (0) target = $region5
    $region4: #{tpu_custom_call.1} parent=1 // pred_region
      %s15 = sadd.s32 0, 0
      %s16 = smul.u32 16, %s15
      %s18 = ssub.s32 1024, 1024
      %19 = vsyncadd [#allocation3], %s18
      %s20 = smul.addr %s16, 64
      %s21 = scalar_lea.hbm %s0, %s20
      %s22 = sshll.u32 [#allocation2], 4
      %s23 = int_to_ptr.vmem [resolvable:$true] %s22
      %28 = dma.hbm_to_vmem [thread:$0]  %s21, 1024, %s23, [#allocation3], 64, 64, 4
    $region5: #{tpu_custom_call.1} parent=1 // pred_fallthru
      _
    // Predicated region
    $region6: #{tpu_custom_call.1} parent=1 // pred_check
      _
    $region7: #{tpu_custom_call.1} parent=1 // pred_check_branch
      %30 = sbr.rel (0) target = $region9
    $region8: #{tpu_custom_call.1} parent=1 // pred_region
      %s32 = ssub.s32 128, 128
      %33 = vsyncadd [#allocation6], %s32
      %s34 = sshll.u32 [#allocation5], 4
      %s35 = int_to_ptr.vmem [resolvable:$true] %s34
      %40 = dma.hbm_to_vmem [thread:$0]  %s1, 128, %s35, [#allocation6], 64, 64, 4
    $region9: #{tpu_custom_call.1} parent=1 // pred_fallthru
      _
    // Predicated region
    $region10: #{tpu_custom_call.1} parent=1 // pred_check
      _
    $region11: #{tpu_custom_call.1} parent=1 // pred_check_branch
      %42 = sbr.rel (0) target = $region13
    $region12: #{tpu_custom_call.1} parent=1 // pred_region
      %43 = dma.done [#allocation3], 1024
    $region13: #{tpu_custom_call.1} parent=1 // pred_fallthru
      _
    // Predicated region
    $region14: #{tpu_custom_call.1} parent=1 // pred_check
      _
    $region15: #{tpu_custom_call.1} parent=1 // pred_check_branch
      %45 = sbr.rel (0) target = $region17
    $region16: #{tpu_custom_call.1} parent=1 // pred_region
      %46 = dma.done [#allocation6], 128
    $region17: #{tpu_custom_call.1} parent=1 // pred_fallthru
      _
    %s47 = sadd.s32 0, 0
    %s48 = smul.u32 16, %s47
    %s49 = sadd.s32 0, 0
    %s50 = smul.u32 16, %s49
    %p52 = scmp.eq.s32.totalorder 0, 0
    // Predicated region
    $region18: #{tpu_custom_call.1} parent=1 // pred_check
      %p53 = pneg %p52
    $region19: #{tpu_custom_call.1} parent=1 // pred_check_branch
      %55 = sbr.rel (%p53) target = $region21
    $region20: #{tpu_custom_call.1} parent=1 // pred_region
      %56 = vst [vmem:[#allocation8] sm:$0x3] 0.0
    $region21: #{tpu_custom_call.1} parent=1 // pred_fallthru
      _
    %v57 = vld [vmem:[#allocation2] sm:$0xf]
    %v58 = vld [vmem:[#allocation2 + $0x4] sm:$0xf]
    %v59 = vld [vmem:[#allocation2 + $0x8] sm:$0xf]
    %v60 = vld [vmem:[#allocation2 + $0xc] sm:$0xf]
    %v61 = vld [vmem:[#allocation2 + $0x10] sm:$0xf]
    %v62 = vld [vmem:[#allocation2 + $0x14] sm:$0xf]
    %v63 = vld [vmem:[#allocation2 + $0x18] sm:$0xf]
    %v64 = vld [vmem:[#allocation2 + $0x1c] sm:$0xf]
    %v65 = vld [vmem:[#allocation2 + $0x20] sm:$0xf]
    %v66 = vld [vmem:[#allocation2 + $0x24] sm:$0xf]
    %v67 = vld [vmem:[#allocation2 + $0x28] sm:$0xf]
    %v68 = vld [vmem:[#allocation2 + $0x2c] sm:$0xf]
    %v69 = vld [vmem:[#allocation2 + $0x30] sm:$0xf]
    %v70 = vld [vmem:[#allocation2 + $0x34] sm:$0xf]
    %v71 = vld [vmem:[#allocation2 + $0x38] sm:$0xf]
    %v72 = vld [vmem:[#allocation2 + $0x3c] sm:$0xf]
    %v73 = vld [vmem:[#allocation5] sm:$0xf]
    %v74 = vld [vmem:[#allocation5 + $0x4] sm:$0xf]
    %v91 = vunpack.c.l.b16 %v57
    %v92 = vunpack.c.l.b16 %v58
    %v93 = vunpack.c.l.b16 %v59
    %v94 = vunpack.c.l.b16 %v60
    %v95 = vunpack.c.l.b16 %v61
    %v96 = vunpack.c.l.b16 %v62
    %v97 = vunpack.c.l.b16 %v63
    %v98 = vunpack.c.l.b16 %v64
    %v99 = vunpack.c.l.b16 %v65
    %v100 = vunpack.c.l.b16 %v66
    %v101 = vunpack.c.l.b16 %v67
    %v102 = vunpack.c.l.b16 %v68
    %v103 = vunpack.c.l.b16 %v69
    %v104 = vunpack.c.l.b16 %v70
    %v105 = vunpack.c.l.b16 %v71
    %v106 = vunpack.c.l.b16 %v72
    %v107 = vpack.c.b16 %v92, %v91
    %v108 = vpack.c.b16 %v94, %v93
    %v109 = vpack.c.b16 %v96, %v95
    %v110 = vpack.c.b16 %v98, %v97
    %v111 = vpack.c.b16 %v100, %v99
    %v112 = vpack.c.b16 %v102, %v101
    %v113 = vpack.c.b16 %v104, %v103
    %v114 = vpack.c.b16 %v106, %v105
    %v117 = vunpack.c.l.b16 %v73
    %v118 = vunpack.c.l.b16 %v74
    %v119 = vpack.c.b16 %v118, %v117
    %vm121 = vcmask 130048
    %v123 = vsel %vm121, %v107, 0
    %v126 = vsel %vm121, %v108, 0
    %v129 = vsel %vm121, %v109, 0
    %v132 = vsel %vm121, %v110, 0
    %v135 = vsel %vm121, %v111, 0
    %v138 = vsel %vm121, %v112, 0
    %v141 = vsel %vm121, %v113, 0
    %v144 = vsel %vm121, %v114, 0
    %146 = vmatprep.subr.bf16.mxu0 0
    %147 = vmatpush1.bf16.msra.mxu0 %v119
    %148 = vmatprep.subr.bf16.mxu0 0
    %149 = vmatpush1.bf16.msra.mxu0 0
    %150 = vmatprep.subr.bf16.mxu0 0
    %151 = vmatpush1.bf16.msra.mxu0 0
    %152 = vmatprep.subr.bf16.mxu0 0
    %153 = vmatpush1.bf16.msra.mxu0 0
    %154 = vmatprep.subr.bf16.mxu0 0
    %155 = vmatpush1.bf16.msra.mxu0 0
    %156 = vmatprep.subr.bf16.mxu0 0
    %157 = vmatpush1.bf16.msra.mxu0 0
    %158 = vmatprep.subr.bf16.mxu0 0
    %159 = vmatpush1.bf16.msra.mxu0 0
    %160 = vmatprep.subr.bf16.mxu0 0
    %161 = vmatpush1.bf16.msra.mxu0 0
    %162 = vmatprep.subr.bf16.mxu0 0
    %163 = vmatpush1.bf16.msra.mxu0 0
    %164 = vmatprep.subr.bf16.mxu0 0
    %165 = vmatpush1.bf16.msra.mxu0 0
    %166 = vmatprep.subr.bf16.mxu0 0
    %167 = vmatpush1.bf16.msra.mxu0 0
    %168 = vmatprep.subr.bf16.mxu0 0
    %169 = vmatpush1.bf16.msra.mxu0 0
    %170 = vmatprep.subr.bf16.mxu0 0
    %171 = vmatpush1.bf16.msra.mxu0 0
    %172 = vmatprep.subr.bf16.mxu0 0
    %173 = vmatpush1.bf16.msra.mxu0 0
    %174 = vmatprep.subr.bf16.mxu0 0
    %175 = vmatpush1.bf16.msra.mxu0 0
    %176 = vmatprep.subr.bf16.mxu0 0
    %177 = vmatpush1.bf16.msra.mxu0 0
    %178 = vmatprep.mubr.bf16.mxu0 0
    %179 = vmatmul.mubr.bf16.gmra.mrb[0].mxu0 %v123
    %v180 = vpop.f32.mrb[0].mxu0
    %v181 = vadd.f32 0.0, %v180
    %v182 = vpop.f32.mrb[0].mxu0
    %v183 = vpop.f32.mrb[0].mxu0
    %v184 = vadd.f32 0.0, %v183
    %v185 = vpop.f32.mrb[0].mxu0
    %186 = vmatprep.mubr.bf16.mxu0 0
    %187 = vmatmul.mubr.bf16.gmra.mrb[0].mxu0 %v126
    %v188 = vpop.f32.mrb[0].mxu0
    %v189 = vadd.f32 0.0, %v188
    %v190 = vpop.f32.mrb[0].mxu0
    %v191 = vpop.f32.mrb[0].mxu0
    %v192 = vadd.f32 0.0, %v191
    %v193 = vpop.f32.mrb[0].mxu0
    %194 = vmatprep.mubr.bf16.mxu0 0
    %195 = vmatmul.mubr.bf16.gmra.mrb[0].mxu0 %v129
    %v196 = vpop.f32.mrb[0].mxu0
    %v197 = vadd.f32 0.0, %v196
    %v198 = vpop.f32.mrb[0].mxu0
    %v199 = vpop.f32.mrb[0].mxu0
    %v200 = vadd.f32 0.0, %v199
    %v201 = vpop.f32.mrb[0].mxu0
    %202 = vmatprep.mubr.bf16.mxu0 0
    %203 = vmatmul.mubr.bf16.gmra.mrb[0].mxu0 %v132
    %v204 = vpop.f32.mrb[0].mxu0
    %v205 = vadd.f32 0.0, %v204
    %v206 = vpop.f32.mrb[0].mxu0
    %v207 = vpop.f32.mrb[0].mxu0
    %v208 = vadd.f32 0.0, %v207
    %v209 = vpop.f32.mrb[0].mxu0
    %210 = vmatprep.mubr.bf16.mxu0 0
    %211 = vmatmul.mubr.bf16.gmra.mrb[0].mxu0 %v135
    %v212 = vpop.f32.mrb[0].mxu0
    %v213 = vadd.f32 0.0, %v212
    %v214 = vpop.f32.mrb[0].mxu0
    %v215 = vpop.f32.mrb[0].mxu0
    %v216 = vadd.f32 0.0, %v215
    %v217 = vpop.f32.mrb[0].mxu0
    %218 = vmatprep.mubr.bf16.mxu0 0
    %219 = vmatmul.mubr.bf16.gmra.mrb[0].mxu0 %v138
    %v220 = vpop.f32.mrb[0].mxu0
    %v221 = vadd.f32 0.0, %v220
    %v222 = vpop.f32.mrb[0].mxu0
    %v223 = vpop.f32.mrb[0].mxu0
    %v224 = vadd.f32 0.0, %v223
    %v225 = vpop.f32.mrb[0].mxu0
    %226 = vmatprep.mubr.bf16.mxu0 0
    %227 = vmatmul.mubr.bf16.gmra.mrb[0].mxu0 %v141
    %v228 = vpop.f32.mrb[0].mxu0
    %v229 = vadd.f32 0.0, %v228
    %v230 = vpop.f32.mrb[0].mxu0
    %v231 = vpop.f32.mrb[0].mxu0
    %v232 = vadd.f32 0.0, %v231
    %v233 = vpop.f32.mrb[0].mxu0
    %234 = vmatprep.mubr.bf16.mxu0 0
    %235 = vmatmul.mubr.bf16.gmra.mrb[0].mxu0 %v144
    %v236 = vpop.f32.mrb[0].mxu0
    %v237 = vadd.f32 0.0, %v236
    %v238 = vpop.f32.mrb[0].mxu0
    %v239 = vpop.f32.mrb[0].mxu0
    %v240 = vadd.f32 0.0, %v239
    %v241 = vpop.f32.mrb[0].mxu0
    %242 = vdwg.mxu0
    %v243 = vpack.c.bf16 %v184, %v181
    %v244 = vpack.c.bf16 %v192, %v189
    %v245 = vpack.c.bf16 %v200, %v197
    %v246 = vpack.c.bf16 %v208, %v205
    %v247 = vpack.c.bf16 %v216, %v213
    %v248 = vpack.c.bf16 %v224, %v221
    %v249 = vpack.c.bf16 %v232, %v229
    %v250 = vpack.c.bf16 %v240, %v237
    %v259 = vunpack.c.l.b16 %v243
    %v260 = vunpack.c.h.b16 %v243
    %v261 = vunpack.c.l.b16 %v244
    %v262 = vunpack.c.h.b16 %v244
    %v263 = vunpack.c.l.b16 %v245
    %v264 = vunpack.c.h.b16 %v245
    %v265 = vunpack.c.l.b16 %v246
    %v266 = vunpack.c.h.b16 %v246
    %v267 = vunpack.c.l.b16 %v247
    %v268 = vunpack.c.h.b16 %v247
    %v269 = vunpack.c.l.b16 %v248
    %v270 = vunpack.c.h.b16 %v248
    %v271 = vunpack.c.l.b16 %v249
    %v272 = vunpack.c.h.b16 %v249
    %v273 = vunpack.c.l.b16 %v250
    %v274 = vunpack.c.h.b16 %v250
    %v275 = vpack.c.b16 %v259, %v259
    %v276 = vpack.c.b16 %v260, %v260
    %v277 = vpack.c.b16 %v261, %v261
    %v278 = vpack.c.b16 %v262, %v262
    %v279 = vpack.c.b16 %v263, %v263
    %v280 = vpack.c.b16 %v264, %v264
    %v281 = vpack.c.b16 %v265, %v265
    %v282 = vpack.c.b16 %v266, %v266
    %v283 = vpack.c.b16 %v267, %v267
    %v284 = vpack.c.b16 %v268, %v268
    %v285 = vpack.c.b16 %v269, %v269
    %v286 = vpack.c.b16 %v270, %v270
    %v287 = vpack.c.b16 %v271, %v271
    %v288 = vpack.c.b16 %v272, %v272
    %v289 = vpack.c.b16 %v273, %v273
    %v290 = vpack.c.b16 %v274, %v274
    %307 = vst [vmem:[#allocation7] sm:$0xf] %v275
    %308 = vst [vmem:[#allocation7 + $0x4] sm:$0xf] %v276
    %309 = vst [vmem:[#allocation7 + $0x8] sm:$0xf] %v277
    %310 = vst [vmem:[#allocation7 + $0xc] sm:$0xf] %v278
    %311 = vst [vmem:[#allocation7 + $0x10] sm:$0xf] %v279
    %312 = vst [vmem:[#allocation7 + $0x14] sm:$0xf] %v280
    %313 = vst [vmem:[#allocation7 + $0x18] sm:$0xf] %v281
    %314 = vst [vmem:[#allocation7 + $0x1c] sm:$0xf] %v282
    %315 = vst [vmem:[#allocation7 + $0x20] sm:$0xf] %v283
    %316 = vst [vmem:[#allocation7 + $0x24] sm:$0xf] %v284
    %317 = vst [vmem:[#allocation7 + $0x28] sm:$0xf] %v285
    %318 = vst [vmem:[#allocation7 + $0x2c] sm:$0xf] %v286
    %319 = vst [vmem:[#allocation7 + $0x30] sm:$0xf] %v287
    %320 = vst [vmem:[#allocation7 + $0x34] sm:$0xf] %v288
    %321 = vst [vmem:[#allocation7 + $0x38] sm:$0xf] %v289
    %322 = vst [vmem:[#allocation7 + $0x3c] sm:$0xf] %v290
    %v323 = vadd.f32 %v181, %v184
    %v324 = vadd.f32 %v323, %v189
    %v325 = vadd.f32 %v324, %v192
    %v326 = vadd.f32 %v325, %v197
    %v327 = vadd.f32 %v326, %v200
    %v328 = vadd.f32 %v327, %v205
    %v329 = vadd.f32 %v328, %v208
    %v330 = vadd.f32 %v329, %v213
    %v331 = vadd.f32 %v330, %v216
    %v332 = vadd.f32 %v331, %v221
    %v333 = vadd.f32 %v332, %v224
    %v334 = vadd.f32 %v333, %v229
    %v335 = vadd.f32 %v334, %v232
    %v336 = vadd.f32 %v335, %v237
    %v337 = vadd.f32 %v336, %v240
    %v338 = vrot.slane %v337, 4
    %v339 = vadd.f32 %v337, %v338
    %v340 = vrot.slane %v339, 2
    %v341 = vadd.f32 %v339, %v340
    %v342 = vrot.slane %v341, 1
    %v343 = vadd.f32 %v341, %v342
    %v344 = vmul.f32 %v181, %v181
    %v345 = vmul.f32 %v184, %v184
    %v346 = vmul.f32 %v189, %v189
    %v347 = vmul.f32 %v192, %v192
    %v348 = vmul.f32 %v197, %v197
    %v349 = vmul.f32 %v200, %v200
    %v350 = vmul.f32 %v205, %v205
    %v351 = vmul.f32 %v208, %v208
    %v352 = vmul.f32 %v213, %v213
    %v353 = vmul.f32 %v216, %v216
    %v354 = vmul.f32 %v221, %v221
    %v355 = vmul.f32 %v224, %v224
    %v356 = vmul.f32 %v229, %v229
    %v357 = vmul.f32 %v232, %v232
    %v358 = vmul.f32 %v237, %v237
    %v359 = vmul.f32 %v240, %v240
    %v360 = vadd.f32 %v344, %v345
    %v361 = vadd.f32 %v360, %v346
    %v362 = vadd.f32 %v361, %v347
    %v363 = vadd.f32 %v362, %v348
    %v364 = vadd.f32 %v363, %v349
    %v365 = vadd.f32 %v364, %v350
    %v366 = vadd.f32 %v365, %v351
    %v367 = vadd.f32 %v366, %v352
    %v368 = vadd.f32 %v367, %v353
    %v369 = vadd.f32 %v368, %v354
    %v370 = vadd.f32 %v369, %v355
    %v371 = vadd.f32 %v370, %v356
    %v372 = vadd.f32 %v371, %v357
    %v373 = vadd.f32 %v372, %v358
    %v374 = vadd.f32 %v373, %v359
    %v375 = vrot.slane %v374, 4
    %v376 = vadd.f32 %v374, %v375
    %v377 = vrot.slane %v376, 2
    %v378 = vadd.f32 %v376, %v377
    %v379 = vrot.slane %v378, 1
    %v380 = vadd.f32 %v378, %v379
    %v381 = vld [vmem:[#allocation8] sm:$0x1]
    %v382 = vadd.f32 %v381, %v343
    %383 = vst [vmem:[#allocation8] sm:$0x1] %v382
    %v384 = vld [vmem:[#allocation8 + $0x1] sm:$0x1]
    %v385 = vadd.f32 %v384, %v380
    %386 = vst [vmem:[#allocation8 + $0x1] sm:$0x1] %v385
    // Predicated region
    $region22: #{tpu_custom_call.1} parent=1 // pred_check
      _
    $region23: #{tpu_custom_call.1} parent=1 // pred_check_branch
      %388 = sbr.rel (0) target = $region25
    $region24: #{tpu_custom_call.1} parent=1 // pred_region
      %s389 = sadd.s32 0, 0
      %s390 = smul.u32 16, %s389
      %s392 = ssub.s32 1024, 1024
      %393 = vsyncadd [#allocation4], %s392
      %s394 = smul.addr %s390, 64
      %s395 = scalar_lea.hbm %s2, %s394
      %s396 = sshll.u32 [#allocation7], 4
      %s397 = int_to_ptr.vmem [resolvable:$true] %s396
      %402 = dma.vmem_to_hbm [thread:$0]  %s397, 1024, %s395, [#allocation4], 64, 64, 4
    $region25: #{tpu_custom_call.1} parent=1 // pred_fallthru
      _
    // Predicated region
    $region26: #{tpu_custom_call.1} parent=1 // pred_check
      _
    $region27: #{tpu_custom_call.1} parent=1 // pred_check_branch
      %404 = sbr.rel (0) target = $region29
    $region28: #{tpu_custom_call.1} parent=1 // pred_region
      %s406 = ssub.s32 32, 32
      %407 = vsyncadd [#allocation9], %s406
      %s409 = sshll.u32 [#allocation8], 4
      %s410 = int_to_ptr.vmem [resolvable:$true] %s409
      %412 = dma.vmem_to_hbm [thread:$0]  %s410, 32, %s3, [#allocation9]
    $region29: #{tpu_custom_call.1} parent=1 // pred_fallthru
      _
    // Predicated region
    $region30: #{tpu_custom_call.1} parent=1 // pred_check
      _
    $region31: #{tpu_custom_call.1} parent=1 // pred_check_branch
      %414 = sbr.rel (0) target = $region33
    $region32: #{tpu_custom_call.1} parent=1 // pred_region
      %415 = dma.done [#allocation4], 1024
    $region33: #{tpu_custom_call.1} parent=1 // pred_fallthru
      _
    // Predicated region
    $region34: #{tpu_custom_call.1} parent=1 // pred_check
      _
    $region35: #{tpu_custom_call.1} parent=1 // pred_check_branch
      %417 = sbr.rel (0) target = $region37
    $region36: #{tpu_custom_call.1} parent=1 // pred_region
      %418 = dma.done [#allocation9], 32
    $region37: #{tpu_custom_call.1} parent=1 // pred_fallthru
      _
    %419 = vsyncpa [#allocation3], 1
    %420 = vsyncpa [#allocation6], 1
    %421 = vsyncpa [#allocation4], 1
    %422 = vsyncpa [#allocation9], 1

</llo_original>
